<compile_context>
chip_gen: v5e
topology: v5e:2x2
jax: 0.10.0
libtpu: 0.0.40
codegen_flags: <defaults>
</compile_context>

<pallas_src>
import jax
import jax.numpy as jnp
from jax.experimental import pallas as pl
from jax.experimental.pallas import tpu as pltpu

SUBLANE = 8  # batch tile must be a multiple of the 8-row sublane count


def _round_up(n, m):
    return ((n + m - 1) // m) * m


def _vmem_limit_bytes():
    # Per-chip scoped-VMEM budget: ~3/4 of physical VMEM, capped at 96 MiB
    # (v5e/v6e: 128 MiB physical -> 96 MiB; v7x: 64 MiB physical -> 48 MiB).
    default_cap = 64 * 1024 * 1024  # conservative fallback: v7x per-core VMEM
    try:
        cap = getattr(pltpu.get_tpu_info(), "vmem_capacity_bytes", default_cap)
    except Exception:
        cap = default_cap
    return min(96 * 1024 * 1024, (cap * 3) // 4)


def _choose_batch_tile(batch, batch_tile):
    # Force a multiple of 8 (the (8,128) rule on the second-to-last block dim).
    tb = _round_up(max(1, min(batch_tile, batch)), SUBLANE)
    # Keep >=2 grid steps when the batch is big enough so the "parallel" axis
    # gives both v7x TensorCores work (single-TC v5e/v6e are unaffected).
    half = _round_up(pl.cdiv(batch, 2), SUBLANE)
    if batch > SUBLANE and tb > half:
        tb = half
    return max(tb, SUBLANE)


def mlp_kernel(x_ref, w1_ref, b1_ref, w2_ref, b2_ref, w3_ref, b3_ref, o_ref):
    """One batch-row tile through linear -> relu -> linear -> relu -> linear."""
    cdt = w1_ref.dtype  # bf16: keep MXU inputs narrow; accumulation stays f32
    h = jnp.dot(x_ref[...], w1_ref[...], preferred_element_type=jnp.float32)
    h = jnp.maximum(h + b1_ref[...], 0.0).astype(cdt)
    h = jnp.dot(h, w2_ref[...], preferred_element_type=jnp.float32)
    h = jnp.maximum(h + b2_ref[...], 0.0).astype(cdt)
    out = jnp.dot(h, w3_ref[...], preferred_element_type=jnp.float32)
    o_ref[...] = (out + b3_ref[...]).astype(o_ref.dtype)


def net_forward(x, w1, b1, w2, b2, w3, b3, *, batch_tile=2048):
    """x: (batch, in_dim).  w_i: (fan_in, fan_out) bf16 (see prepare_params);
    b_i: (1, fan_out) f32.  Returns (batch, out_dim) f32."""
    batch, in_dim = x.shape
    h0, h1, out_dim = w1.shape[1], w2.shape[1], w3.shape[1]
    assert w1.shape[0] == in_dim and w2.shape[0] == h0 and w3.shape[0] == h1

    compute_dtype = w1.dtype
    if x.dtype != compute_dtype:
        # Ideally the caller already feeds bf16; this is the only per-call cast.
        x = x.astype(compute_dtype)

    tb = _choose_batch_tile(batch, batch_tile)
    grid = (pl.cdiv(batch, tb),)  # edge tile: OOB reads harmless, OOB writes dropped

    def resident(shape):
        # Whole-array block + constant index -> stays VMEM-resident across the
        # grid; single-buffered since the block never changes (halves the
        # resident weight footprint, important under v7x's 64 MiB VMEM).
        return pl.BlockSpec(shape, lambda i: (0, 0), pipeline_mode=pl.Buffered(1))

    return pl.pallas_call(
        mlp_kernel,
        out_shape=jax.ShapeDtypeStruct((batch, out_dim), jnp.float32),
        grid=grid,
        in_specs=[
            pl.BlockSpec((tb, in_dim), lambda i: (i, 0)),     # x: streamed row tiles
            resident((in_dim, h0)), resident((1, h0)),        # w1, b1
            resident((h0, h1)), resident((1, h1)),            # w2, b2
            resident((h1, out_dim)), resident((1, out_dim)),  # w3, b3
        ],
        out_specs=pl.BlockSpec((tb, out_dim), lambda i: (i, 0)),  # true-width store
        compiler_params=pltpu.CompilerParams(
            dimension_semantics=("parallel",),  # v7x: both TCs split the batch axis
            vmem_limit_bytes=_vmem_limit_bytes(),
        ),
    )(x, w1, b1, w2, b2, w3, b3)


def init_params(key, in_dim, h0, h1, out_dim):
    # Deterministic synthetic init (mimics nn.Linear's U(-1/sqrt(fan_in), +...)),
    # stored already transposed as (fan_in, fan_out) so the kernel does x @ W + b.
    ks = jax.random.split(key, 6)

    def linear(kw, kb, fan_in, fan_out):
        bound = 1.0 / jnp.sqrt(jnp.float32(fan_in))
        w = jax.random.uniform(kw, (fan_in, fan_out), jnp.float32, -bound, bound)
        b = jax.random.uniform(kb, (1, fan_out), jnp.float32, -bound, bound)
        return w, b

    w1, b1 = linear(ks[0], ks[1], in_dim, h0)
    w2, b2 = linear(ks[2], ks[3], h0, h1)
    w3, b3 = linear(ks[4], ks[5], h1, out_dim)
    return w1, b1, w2, b2, w3, b3


def prepare_params(w1, b1, w2, b2, w3, b3, compute_dtype=jnp.bfloat16):
    """One-time param prep (hoisted out of the per-call path): cast weights to
    bf16; biases stay f32 since they are added to the f32 MXU accumulators."""
    return (w1.astype(compute_dtype), b1.astype(jnp.float32),
            w2.astype(compute_dtype), b2.astype(jnp.float32),
            w3.astype(compute_dtype), b3.astype(jnp.float32))


if __name__ == "__main__":
    # Small shapes consistent with the module: Net(input, hiden0, hiden1, output)
    batch, in_dim, h0, h1, out_dim = 8, 32, 64, 32, 1

    key = jax.random.PRNGKey(0)
    k_x, k_p = jax.random.split(key)
    x = jax.random.normal(k_x, (batch, in_dim), jnp.float32)

    params_f32 = init_params(k_p, in_dim, h0, h1, out_dim)
    params = prepare_params(*params_f32)        # one-time cast, not per forward
    x_bf16 = x.astype(jnp.bfloat16)             # cast the activation stream once

    y = net_forward(x_bf16, *params)
    y = jax.block_until_ready(y)

    # Reference mirroring the kernel math (bf16 MXU inputs, f32 accumulation).
    w1, b1, w2, b2, w3, b3 = params

    def dotf32(a, b):
        return jnp.dot(a, b, preferred_element_type=jnp.float32)

    h = jnp.maximum(dotf32(x_bf16, w1) + b1, 0.0).astype(jnp.bfloat16)
    h = jnp.maximum(dotf32(h, w2) + b2, 0.0).astype(jnp.bfloat16)
    ref = dotf32(h, w3) + b3

    assert y.shape == (batch, out_dim)
    assert jnp.allclose(y, ref, atol=1e-4, rtol=1e-4)

    print("KERNEL_OK")
</pallas_src>

<mosaic_0001>
module attributes {stable_mosaic.version = 11 : i64} {
  func.func @mlp_kernel(%arg0: i32, %arg1: memref<8x32xbf16, #tpu.memory_space<vmem>>, %arg2: memref<32x64xbf16, #tpu.memory_space<vmem>>, %arg3: memref<1x64xf32, #tpu.memory_space<vmem>>, %arg4: memref<64x32xbf16, #tpu.memory_space<vmem>>, %arg5: memref<1x32xf32, #tpu.memory_space<vmem>>, %arg6: memref<32x1xbf16, #tpu.memory_space<vmem>>, %arg7: memref<1x1xf32, #tpu.memory_space<vmem>>, %arg8: memref<8x1xf32, #tpu.memory_space<vmem>>) attributes {dimension_semantics = [#tpu.dimension_semantics<parallel>], iteration_bounds = array<i64: 1>, scalar_prefetch = 0 : i64, scratch_operands = 0 : i64, tpu.core_type = #tpu.core_type<tc>, window_params = [{transform_indices = @transform_0, window_bounds = array<i64: 8, 32>}, {pipeline_mode = #tpu.pipeline_mode<synchronous>, transform_indices = @transform_1, window_bounds = array<i64: 32, 64>}, {pipeline_mode = #tpu.pipeline_mode<synchronous>, transform_indices = @transform_2, window_bounds = array<i64: 1, 64>}, {pipeline_mode = #tpu.pipeline_mode<synchronous>, transform_indices = @transform_3, window_bounds = array<i64: 64, 32>}, {pipeline_mode = #tpu.pipeline_mode<synchronous>, transform_indices = @transform_4, window_bounds = array<i64: 1, 32>}, {pipeline_mode = #tpu.pipeline_mode<synchronous>, transform_indices = @transform_5, window_bounds = array<i64: 32, 1>}, {pipeline_mode = #tpu.pipeline_mode<synchronous>, transform_indices = @transform_6, window_bounds = array<i64: 1, 1>}, {transform_indices = @transform_7, window_bounds = array<i64: 8, 1>}]} {
    %c0 = arith.constant 0 : index
    %c0_0 = arith.constant 0 : index
    %0 = vector.load %arg1[%c0, %c0_0] : memref<8x32xbf16, #tpu.memory_space<vmem>>, vector<8x32xbf16>
    %c0_1 = arith.constant 0 : index
    %c0_2 = arith.constant 0 : index
    %1 = vector.load %arg2[%c0_1, %c0_2] : memref<32x64xbf16, #tpu.memory_space<vmem>>, vector<32x64xbf16>
    %cst = arith.constant dense<0.000000e+00> : vector<8x64xf32>
    %2 = tpu.matmul %0, %1, %cst {dimension_numbers = #tpu.dot_dimension_numbers<[1], [0], [0], [1], [0, 0, 1, 1], [], []>} : vector<8x32xbf16>, vector<32x64xbf16>, vector<8x64xf32> -> vector<8x64xf32>
    %c0_3 = arith.constant 0 : index
    %c0_4 = arith.constant 0 : index
    %3 = vector.load %arg3[%c0_3, %c0_4] : memref<1x64xf32, #tpu.memory_space<vmem>>, vector<1x64xf32>
    %4 = vector.broadcast %3 : vector<1x64xf32> to vector<8x64xf32>
    %5 = arith.addf %2, %4 : vector<8x64xf32>
    %cst_5 = arith.constant 0.000000e+00 : f32
    %6 = vector.broadcast %cst_5 : f32 to vector<8x64xf32>
    %7 = arith.maximumf %5, %6 : vector<8x64xf32>
    %8 = arith.truncf %7 : vector<8x64xf32> to vector<8x64xbf16>
    %c0_6 = arith.constant 0 : index
    %c0_7 = arith.constant 0 : index
    %9 = vector.load %arg4[%c0_6, %c0_7] : memref<64x32xbf16, #tpu.memory_space<vmem>>, vector<64x32xbf16>
    %cst_8 = arith.constant dense<0.000000e+00> : vector<8x32xf32>
    %10 = tpu.matmul %8, %9, %cst_8 {dimension_numbers = #tpu.dot_dimension_numbers<[1], [0], [0], [1], [0, 0, 1, 1], [], []>} : vector<8x64xbf16>, vector<64x32xbf16>, vector<8x32xf32> -> vector<8x32xf32>
    %c0_9 = arith.constant 0 : index
    %c0_10 = arith.constant 0 : index
    %11 = vector.load %arg5[%c0_9, %c0_10] : memref<1x32xf32, #tpu.memory_space<vmem>>, vector<1x32xf32>
    %12 = vector.broadcast %11 : vector<1x32xf32> to vector<8x32xf32>
    %13 = arith.addf %10, %12 : vector<8x32xf32>
    %cst_11 = arith.constant 0.000000e+00 : f32
    %14 = vector.broadcast %cst_11 : f32 to vector<8x32xf32>
    %15 = arith.maximumf %13, %14 : vector<8x32xf32>
    %16 = arith.truncf %15 : vector<8x32xf32> to vector<8x32xbf16>
    %c0_12 = arith.constant 0 : index
    %c0_13 = arith.constant 0 : index
    %17 = vector.load %arg6[%c0_12, %c0_13] : memref<32x1xbf16, #tpu.memory_space<vmem>>, vector<32x1xbf16>
    %cst_14 = arith.constant dense<0.000000e+00> : vector<8x1xf32>
    %18 = tpu.matmul %16, %17, %cst_14 {dimension_numbers = #tpu.dot_dimension_numbers<[1], [0], [0], [1], [0, 0, 1, 1], [], []>} : vector<8x32xbf16>, vector<32x1xbf16>, vector<8x1xf32> -> vector<8x1xf32>
    %c0_15 = arith.constant 0 : index
    %c0_16 = arith.constant 0 : index
    %19 = vector.load %arg7[%c0_15, %c0_16] : memref<1x1xf32, #tpu.memory_space<vmem>>, vector<1x1xf32>
    %20 = vector.broadcast %19 : vector<1x1xf32> to vector<8x1xf32>
    %21 = arith.addf %18, %20 : vector<8x1xf32>
    %c0_17 = arith.constant 0 : index
    %c0_18 = arith.constant 0 : index
    %22 = vector.load %arg8[%c0_17, %c0_18] : memref<8x1xf32, #tpu.memory_space<vmem>>, vector<8x1xf32>
    tpu.vector_store %arg8[%c0_17, %c0_18], %21 {strides = array<i32>} : memref<8x1xf32, #tpu.memory_space<vmem>>, vector<8x1xf32>,
    return
  }
  func.func @transform_0(%arg0: i32) -> (i32, i32) {
    %c0_i32 = arith.constant 0 : i32
    %c0_i32_0 = arith.constant 0 : i32
    return %arg0, %c0_i32 : i32, i32
  }
  func.func @transform_1(%arg0: i32) -> (i32, i32) {
    %c0_i32 = arith.constant 0 : i32
    %c0_i32_0 = arith.constant 0 : i32
    %c0_i32_1 = arith.constant 0 : i32
    return %c0_i32, %c0_i32_0 : i32, i32
  }
  func.func @transform_2(%arg0: i32) -> (i32, i32) {
    %c0_i32 = arith.constant 0 : i32
    %c0_i32_0 = arith.constant 0 : i32
    %c0_i32_1 = arith.constant 0 : i32
    return %c0_i32, %c0_i32_0 : i32, i32
  }
  func.func @transform_3(%arg0: i32) -> (i32, i32) {
    %c0_i32 = arith.constant 0 : i32
    %c0_i32_0 = arith.constant 0 : i32
    %c0_i32_1 = arith.constant 0 : i32
    return %c0_i32, %c0_i32_0 : i32, i32
  }
  func.func @transform_4(%arg0: i32) -> (i32, i32) {
    %c0_i32 = arith.constant 0 : i32
    %c0_i32_0 = arith.constant 0 : i32
    %c0_i32_1 = arith.constant 0 : i32
    return %c0_i32, %c0_i32_0 : i32, i32
  }
  func.func @transform_5(%arg0: i32) -> (i32, i32) {
    %c0_i32 = arith.constant 0 : i32
    %c0_i32_0 = arith.constant 0 : i32
    %c0_i32_1 = arith.constant 0 : i32
    return %c0_i32, %c0_i32_0 : i32, i32
  }
  func.func @transform_6(%arg0: i32) -> (i32, i32) {
    %c0_i32 = arith.constant 0 : i32
    %c0_i32_0 = arith.constant 0 : i32
    %c0_i32_1 = arith.constant 0 : i32
    return %c0_i32, %c0_i32_0 : i32, i32
  }
  func.func @transform_7(%arg0: i32) -> (i32, i32) {
    %c0_i32 = arith.constant 0 : i32
    %c0_i32_0 = arith.constant 0 : i32
    return %arg0, %c0_i32 : i32, i32
  }
}

</mosaic_0001>

<llo_original>
// kernel: tpu_custom_call.1
$region0: #{tpu_custom_call.1}
  #allocation0 [shape = 'u32[]', space=smem, size = 0x4, offset = 0x4, fixed_abs, tag = 'smem constant byte address 0x4 - core index']
  #allocation1 [shape = 'u32[72,128]{1,0:T(1,128)}', space=vmem, size = 0x9000, scoped, tag = 'internal scratch']
  #allocation2 [shape = 'f32[1,1]{1,0:T(1,128)S(1)}', space=vmem, size = 0x200, scoped, tag = 'scoped memory for tpu_custom_call.1']
  %s0 = inlined_call_operand.vmem [shape: bf16[8,32], index: 0, kind: input, shape index: {}]
  %s1 = inlined_call_operand.vmem [shape: bf16[32,64], index: 1, kind: input, shape index: {}]
  %s2 = inlined_call_operand.vmem [shape: f32[1,64], index: 2, kind: input, shape index: {}]
  %s3 = inlined_call_operand.vmem [shape: bf16[64,32], index: 3, kind: input, shape index: {}]
  %s4 = inlined_call_operand.vmem [shape: f32[1,32], index: 4, kind: input, shape index: {}]
  %s5 = inlined_call_operand.vmem [shape: bf16[32,1], index: 5, kind: input, shape index: {}]
  %s6 = inlined_call_operand.<no memory space> [shape: f32[1,1], index: 6, kind: input, shape index: {}]
  %s7 = inlined_call_operand.vmem [shape: f32[8,1], index: 7, kind: output, shape index: {}]
  %s8 = sld [smem:[#allocation0]]
  $region38: #{tpu_custom_call.1} parent=0
    _
  %s10 = ssub.s32 1, %s8
  %s11 = scalar_select 0, %s10, %s8
  %v12 = vstv %s6
  %13 = vst [vmem:[#allocation2] sm:$0x1] %v12
  // Predicated region
  $region2: #{tpu_custom_call.1} parent=0 // pred_check
    _
  $region3: #{tpu_custom_call.1} parent=0 // pred_check_branch
    %15 = sbr.rel (0) target = $region5
  $region4: #{tpu_custom_call.1} parent=0 // pred_region
    _
  $region5: #{tpu_custom_call.1} parent=0 // pred_fallthru
    _
  // Predicated region
  $region6: #{tpu_custom_call.1} parent=0 // pred_check
    _
  $region7: #{tpu_custom_call.1} parent=0 // pred_check_branch
    %17 = sbr.rel (0) target = $region9
  $region8: #{tpu_custom_call.1} parent=0 // pred_region
    _
  $region9: #{tpu_custom_call.1} parent=0 // pred_fallthru
    _
  // Predicated region
  $region10: #{tpu_custom_call.1} parent=0 // pred_check
    _
  $region11: #{tpu_custom_call.1} parent=0 // pred_check_branch
    %19 = sbr.rel (0) target = $region13
  $region12: #{tpu_custom_call.1} parent=0 // pred_region
    _
  $region13: #{tpu_custom_call.1} parent=0 // pred_fallthru
    _
  // Predicated region
  $region14: #{tpu_custom_call.1} parent=0 // pred_check
    _
  $region15: #{tpu_custom_call.1} parent=0 // pred_check_branch
    %21 = sbr.rel (0) target = $region17
  $region16: #{tpu_custom_call.1} parent=0 // pred_region
    _
  $region17: #{tpu_custom_call.1} parent=0 // pred_fallthru
    _
  // Predicated region
  $region18: #{tpu_custom_call.1} parent=0 // pred_check
    _
  $region19: #{tpu_custom_call.1} parent=0 // pred_check_branch
    %23 = sbr.rel (0) target = $region21
  $region20: #{tpu_custom_call.1} parent=0 // pred_region
    _
  $region21: #{tpu_custom_call.1} parent=0 // pred_fallthru
    _
  // Predicated region
  $region22: #{tpu_custom_call.1} parent=0 // pred_check
    _
  $region23: #{tpu_custom_call.1} parent=0 // pred_check_branch
    %25 = sbr.rel (0) target = $region25
  $region24: #{tpu_custom_call.1} parent=0 // pred_region
    _
  $region25: #{tpu_custom_call.1} parent=0 // pred_fallthru
    _
  // Predicated region
  $region26: #{tpu_custom_call.1} parent=0 // pred_check
    _
  $region27: #{tpu_custom_call.1} parent=0 // pred_check_branch
    %27 = sbr.rel (0) target = $region29
  $region28: #{tpu_custom_call.1} parent=0 // pred_region
    _
  $region29: #{tpu_custom_call.1} parent=0 // pred_fallthru
    _
  %v29 = vld [vmem:[%s0] sm:$0xf]
  %v30 = vld [vmem:[%s1] sm:$0xf]
  %v31 = vld [vmem:[%s1 + $0x4] sm:$0xf]
  %v32 = vld [vmem:[%s1 + $0x8] sm:$0xf]
  %v33 = vld [vmem:[%s1 + $0xc] sm:$0xf]
  %v34 = vld [vmem:[%s2] sm:$0x1]
  %v36 = vperm.slane %v34, 0
  %v42 = vunpack.c.l.b16 %v30
  %v43 = vunpack.c.l.b16 %v31
  %v44 = vunpack.c.l.b16 %v32
  %v45 = vunpack.c.l.b16 %v33
  %v46 = vpack.c.b16 %v43, %v42
  %v47 = vpack.c.b16 %v45, %v44
  %vm50 = vcmask 261120
  %v52 = vsel %vm50, %v29, 0
  %54 = vmatpush.bf16.msra.mxu0 0
  %55 = vmatpush.bf16.msra.mxu0 0
  %56 = vmatpush.bf16.msra.mxu0 0
  %57 = vmatpush.bf16.msra.mxu0 0
  %58 = vmatpush.bf16.msra.mxu0 0
  %59 = vmatpush.bf16.msra.mxu0 0
  %60 = vmatpush.bf16.msra.mxu0 %v47
  %61 = vmatpush.bf16.msra.mxu0 %v46
  %62 = vmatmul.bf16.gmra.mxu0 %v52
  %v63 = vpop.f32.mrf.mxu0
  %v64 = vadd.f32 %v36, %v63
  %v65 = vpop.f32.mrf.mxu0
  %66 = vdwg.mxu0
  %v67 = vmax.f32 %v64, 0.0
  %v68 = vpack.c.bf16 %v67, %v67
  %v69 = vld [vmem:[%s3] sm:$0xf]
  %v70 = vld [vmem:[%s3 + $0x4] sm:$0xf]
  %v71 = vld [vmem:[%s3 + $0x8] sm:$0xf]
  %v72 = vld [vmem:[%s3 + $0xc] sm:$0xf]
  %v73 = vld [vmem:[%s3 + $0x10] sm:$0xf]
  %v74 = vld [vmem:[%s3 + $0x14] sm:$0xf]
  %v75 = vld [vmem:[%s3 + $0x18] sm:$0xf]
  %v76 = vld [vmem:[%s3 + $0x1c] sm:$0xf]
  %v77 = vld [vmem:[%s4] sm:$0x1]
  %v79 = vperm.slane %v77, 0
  %v89 = vunpack.c.l.b16 %v69
  %v90 = vunpack.c.l.b16 %v70
  %v91 = vunpack.c.l.b16 %v71
  %v92 = vunpack.c.l.b16 %v72
  %v93 = vunpack.c.l.b16 %v73
  %v94 = vunpack.c.l.b16 %v74
  %v95 = vunpack.c.l.b16 %v75
  %v96 = vunpack.c.l.b16 %v76
  %v97 = vpack.c.b16 %v90, %v89
  %v98 = vpack.c.b16 %v92, %v91
  %v99 = vpack.c.b16 %v94, %v93
  %v100 = vpack.c.b16 %v96, %v95
  %vm105 = vcmask 523264
  %v107 = vsel %vm105, %v68, 0
  %109 = vmatpush.bf16.msra.mxu0 0
  %110 = vmatpush.bf16.msra.mxu0 0
  %111 = vmatpush.bf16.msra.mxu0 0
  %112 = vmatpush.bf16.msra.mxu0 0
  %113 = vmatpush.bf16.msra.mxu0 %v100
  %114 = vmatpush.bf16.msra.mxu0 %v99
  %115 = vmatpush.bf16.msra.mxu0 %v98
  %116 = vmatpush.bf16.msra.mxu0 %v97
  %117 = vmatmul.bf16.gmra.mxu0 %v107
  %v118 = vpop.f32.mrf.mxu0
  %v119 = vadd.f32 %v79, %v118
  %v120 = vpop.f32.mrf.mxu0
  %121 = vdwg.mxu0
  %v122 = vmax.f32 %v119, 0.0
  %v123 = vpack.c.bf16 %v122, %v122
  %v124 = vld [vmem:[%s5] sm:$0xf]
  %v125 = vld [vmem:[%s5 + $0x4] sm:$0xf]
  %v126 = vld [vmem:[%s5 + $0x8] sm:$0xf]
  %v127 = vld [vmem:[%s5 + $0xc] sm:$0xf]
  %v128 = vld [vmem:[#allocation2] sm:$0x1]
  %v130 = vperm.slane %v128, 0
  %v136 = vunpack.c.l.b16 %v124
  %v137 = vunpack.c.l.b16 %v125
  %v138 = vunpack.c.l.b16 %v126
  %v139 = vunpack.c.l.b16 %v127
  %v140 = vpack.c.b16 %v137, %v136
  %v141 = vpack.c.b16 %v139, %v138
  %v145 = vsel %vm50, %v123, 0
  %147 = vmatpush.bf16.msra.mxu0 0
  %148 = vmatpush.bf16.msra.mxu0 0
  %149 = vmatpush.bf16.msra.mxu0 0
  %150 = vmatpush.bf16.msra.mxu0 0
  %151 = vmatpush.bf16.msra.mxu0 0
  %152 = vmatpush.bf16.msra.mxu0 0
  %153 = vmatpush.bf16.msra.mxu0 %v141
  %154 = vmatpush.bf16.msra.mxu0 %v140
  %155 = vmatmul.bf16.gmra.mxu0 %v145
  %v156 = vpop.f32.mrf.mxu0
  %v157 = vadd.f32 %v130, %v156
  %v158 = vpop.f32.mrf.mxu0
  %159 = vdwg.mxu0
  %vm160 = vcmask 7168
  %161 = vst.msk [vmem:[%s7] sm:$0xff] %vm160, %v157
  // Predicated region
  $region30: #{tpu_custom_call.1} parent=0 // pred_check
    _
  $region31: #{tpu_custom_call.1} parent=0 // pred_check_branch
    %163 = sbr.rel (0) target = $region33
  $region32: #{tpu_custom_call.1} parent=0 // pred_region
    _
  $region33: #{tpu_custom_call.1} parent=0 // pred_fallthru
    _
  // Predicated region
  $region34: #{tpu_custom_call.1} parent=0 // pred_check
    _
  $region35: #{tpu_custom_call.1} parent=0 // pred_check_branch
    %165 = sbr.rel (0) target = $region37
  $region36: #{tpu_custom_call.1} parent=0 // pred_region
    _
  $region37: #{tpu_custom_call.1} parent=0 // pred_fallthru
    _

</llo_original>
